<compile_context>
chip_gen: v7x
topology: tpu7x:2x2x1
jax: 0.10.0
libtpu: 0.0.40
codegen_flags: <defaults>
</compile_context>

<pallas_src>
import functools

import jax
import jax.numpy as jnp
from jax.experimental import pallas as pl
from jax.experimental.pallas import tpu as pltpu


def _round_up(x, m):
    return ((x + m - 1) // m) * m


def _num_tensorcores():
    """Best-effort TensorCore-per-device count (v7x = 2, v5e/v6e = 1)."""
    try:
        dev = jax.devices()[0]
        for attr in ("num_cores", "core_count"):
            n = getattr(dev, attr, None)
            if isinstance(n, int) and n > 0:
                return n
    except Exception:
        pass
    return 1


# ---------------------------------------------------------------------------
# Fused MLP + log_softmax kernel
# ---------------------------------------------------------------------------

def _mlp_dropout_kernel(x_ref, w1_ref, b1_ref, w2_ref, b2_ref, w3_ref, b3_ref,
                        o_ref, *, matmul_dtype):
    """One batch tile: relu(x@w1+b1) -> relu(.@w2+b2) -> log_softmax(.@w3+b3).

    Dropout layers are identity (eval mode). All intermediates stay in
    vregs/VMEM; accumulation and the epilogue (bias, ReLU, softmax) are f32.
    """
    x = x_ref[...]

    # dr2(x): identity in eval mode.
    h = jnp.dot(x.astype(matmul_dtype), w1_ref[...].astype(matmul_dtype),
                preferred_element_type=jnp.float32)
    h = jnp.maximum(h + b1_ref[...], 0.0)

    # dr1: identity in eval mode.
    h = jnp.dot(h.astype(matmul_dtype), w2_ref[...].astype(matmul_dtype),
                preferred_element_type=jnp.float32)
    h = jnp.maximum(h + b2_ref[...], 0.0)

    # dr1: identity in eval mode.
    logits = jnp.dot(h.astype(matmul_dtype), w3_ref[...].astype(matmul_dtype),
                     preferred_element_type=jnp.float32)
    logits = logits + b3_ref[...]

    # Numerically stable log_softmax over dim=1 (per-row lane reduction; exp
    # and log go to the EUP slot, effectively free next to the matmuls).
    m = jnp.max(logits, axis=-1, keepdims=True)
    shifted = logits - m
    lse = jnp.log(jnp.sum(jnp.exp(shifted), axis=-1, keepdims=True))
    o_ref[...] = (shifted - lse).astype(o_ref.dtype)


def classifier_mlp_dropout_forward(x, params, *, tm=512,
                                   matmul_dtype=jnp.float32,
                                   num_cores=None):
    """Fused forward pass of Classifier_MLPDropout (eval mode).

    x:      (B, in_dim) float32
    params: dict with pre-transposed weights w1:(in,hid) w2:(hid,hid)
            w3:(hid,out) and biases b1/b2/b3 shaped (1, N).
    tm:     batch tile; sweep 256-1024 (watch vreg pressure for narrow
            feature dims -- review #7).
    """
    B, in_dim = x.shape
    hidden = params["w1"].shape[1]
    out_dim = params["w3"].shape[1]

    if num_cores is None:
        num_cores = _num_tensorcores()

    # ---- Batch tiling (reviews #1, #2) ------------------------------------
    tm_r = _round_up(max(int(tm), 8), 8)
    if num_cores > 1:
        # Ensure >= num_cores grid steps so "parallel" sharding across v7x's
        # two TensorCores actually happens at large B.
        tm_r = min(tm_r, _round_up(pl.cdiv(B, num_cores), 8))
    # Single full-batch tile when it fits; otherwise a multiple-of-8 tile with
    # a (masked) partial last tile.
    tm_eff = B if B <= tm_r else tm_r
    grid = (pl.cdiv(B, tm_eff),)

    # ---- Weight residency / buffering (review #3) -------------------------
    weight_bytes = sum(int(v.size) * v.dtype.itemsize for v in params.values())
    # Double-buffering constant-index weight blocks only wastes VMEM; switch
    # to single buffering once the parameter footprint is non-trivial.
    single_buffer_weights = weight_bytes > (1 << 20)
    w_kwargs = ({"pipeline_mode": pl.Buffered(1)}
                if single_buffer_weights else {})

    def w_spec(shape):
        return pl.BlockSpec(shape, lambda i: (0, 0), **w_kwargs)

    # ---- Explicit VMEM budget (review #4) ----------------------------------
    x_tile_bytes = tm_eff * in_dim * 4
    out_tile_bytes = tm_eff * out_dim * 4
    w_bufs = 1 if single_buffer_weights else 2
    needed = (w_bufs * weight_bytes
              + 2 * x_tile_bytes + 2 * out_tile_bytes
              + 6 * tm_eff * max(hidden, out_dim) * 4)   # intermediate headroom
    # Generous 2x margin, floored at 16 MiB, capped well under v7x's 64 MiB.
    vmem_limit = int(min(max(2 * needed, 16 << 20), 48 << 20))

    # ---- Cost estimate for the surrounding XLA schedule (review #8) --------
    flops = 2 * B * (in_dim * hidden + hidden * hidden + hidden * out_dim)
    bytes_accessed = (int(x.size) * x.dtype.itemsize + weight_bytes
                      + B * out_dim * 4)
    cost = pl.CostEstimate(flops=flops,
                           transcendentals=B * (out_dim + 1),
                           bytes_accessed=bytes_accessed)

    kernel = functools.partial(_mlp_dropout_kernel, matmul_dtype=matmul_dtype)

    return pl.pallas_call(
        kernel,
        out_shape=jax.ShapeDtypeStruct((B, out_dim), jnp.float32),
        grid=grid,
        in_specs=[
            pl.BlockSpec((tm_eff, in_dim), lambda i: (i, 0)),   # x tile
            w_spec((in_dim, hidden)),                           # w1 (resident)
            w_spec((1, hidden)),                                # b1
            w_spec((hidden, hidden)),                           # w2
            w_spec((1, hidden)),                                # b2
            w_spec((hidden, out_dim)),                          # w3
            w_spec((1, out_dim)),                               # b3
        ],
        out_specs=pl.BlockSpec((tm_eff, out_dim), lambda i: (i, 0)),
        compiler_params=pltpu.CompilerParams(
            # Batch tiles are independent -> shards across v7x's 2 TCs when
            # the grid has >1 step; harmless on single-TC v5e/v6e.
            dimension_semantics=("parallel",),
            vmem_limit_bytes=vmem_limit,
        ),
        cost_estimate=cost,
    )(x, params["w1"], params["b1"], params["w2"], params["b2"],
      params["w3"], params["b3"])


# ---------------------------------------------------------------------------
# Deterministic parameter init (PyTorch nn.Linear-style uniform bounds),
# stored pre-transposed so the forward pass emits no layout ops.
# ---------------------------------------------------------------------------

def init_params(key, in_dim, hidden_dim, out_dim, dtype=jnp.float32):
    def linear(key, fan_in, fan_out):
        kw, kb = jax.random.split(key)
        bound = 1.0 / jnp.sqrt(jnp.float32(fan_in))
        # Stored as (K, N) = (fan_in, fan_out): already transposed for x @ w.
        w = jax.random.uniform(kw, (fan_in, fan_out), jnp.float32,
                               -bound, bound).astype(dtype)
        b = jax.random.uniform(kb, (1, fan_out), jnp.float32,
                               -bound, bound).astype(dtype)
        return w, b

    k1, k2, k3 = jax.random.split(key, 3)
    w1, b1 = linear(k1, in_dim, hidden_dim)
    w2, b2 = linear(k2, hidden_dim, hidden_dim)
    w3, b3 = linear(k3, hidden_dim, out_dim)
    return {"w1": w1, "b1": b1, "w2": w2, "b2": b2, "w3": w3, "b3": b3}


# ---------------------------------------------------------------------------
# Pure-JAX reference (for correctness assertion only)
# ---------------------------------------------------------------------------

def _ref_forward(x, params):
    h = jnp.maximum(x @ params["w1"] + params["b1"], 0.0)
    h = jnp.maximum(h @ params["w2"] + params["b2"], 0.0)
    logits = h @ params["w3"] + params["b3"]
    return jax.nn.log_softmax(logits, axis=1)


if __name__ == "__main__":
    in_dim, hidden_dim, out_dim = 16, 32, 10

    key = jax.random.PRNGKey(0)
    k_param, k_x1, k_x2 = jax.random.split(key, 3)
    params = init_params(k_param, in_dim, hidden_dim, out_dim)

    # --- Case 1: small batch, single full-batch tile -----------------------
    batch = 8
    x = jax.random.normal(k_x1, (batch, in_dim), jnp.float32)
    out = jax.jit(classifier_mlp_dropout_forward)(x, params)
    out = jax.block_until_ready(out)
    assert out.shape == (batch, out_dim), out.shape
    ref = _ref_forward(x, params)
    assert jnp.allclose(out, ref, atol=1e-5, rtol=1e-5), float(
        jnp.max(jnp.abs(out - ref)))
    assert jnp.allclose(jnp.exp(out).sum(axis=1), 1.0, atol=1e-5)

    # --- Case 2: multi-step grid with a partial last tile ------------------
    batch2 = 40                    # tm=16 -> grid of 3 steps, last tile ragged
    x2 = jax.random.normal(k_x2, (batch2, in_dim), jnp.float32)
    out2 = jax.jit(
        functools.partial(classifier_mlp_dropout_forward, tm=16))(x2, params)
    out2 = jax.block_until_ready(out2)
    assert out2.shape == (batch2, out_dim), out2.shape
    ref2 = _ref_forward(x2, params)
    assert jnp.allclose(out2, ref2, atol=1e-5, rtol=1e-5), float(
        jnp.max(jnp.abs(out2 - ref2)))

    print("KERNEL_OK")
</pallas_src>

<mosaic_0001>
module attributes {stable_mosaic.version = 11 : i64} {
  func.func @_mlp_dropout_kernel(%arg0: i32, %arg1: memref<8x16xf32, #tpu.memory_space<vmem>>, %arg2: memref<16x32xf32, #tpu.memory_space<vmem>>, %arg3: memref<1x32xf32, #tpu.memory_space<vmem>>, %arg4: memref<32x32xf32, #tpu.memory_space<vmem>>, %arg5: memref<1x32xf32, #tpu.memory_space<vmem>>, %arg6: memref<32x10xf32, #tpu.memory_space<vmem>>, %arg7: memref<1x10xf32, #tpu.memory_space<vmem>>, %arg8: memref<8x10xf32, #tpu.memory_space<vmem>>) attributes {dimension_semantics = [#tpu.dimension_semantics<parallel>], iteration_bounds = array<i64: 1>, scalar_prefetch = 0 : i64, scratch_operands = 0 : i64, tpu.core_type = #tpu.core_type<tc>, window_params = [{transform_indices = @transform_0, window_bounds = array<i64: 8, 16>}, {pipeline_mode = #tpu.pipeline_mode<synchronous>, transform_indices = @transform_1, window_bounds = array<i64: 16, 32>}, {pipeline_mode = #tpu.pipeline_mode<synchronous>, transform_indices = @transform_2, window_bounds = array<i64: 1, 32>}, {pipeline_mode = #tpu.pipeline_mode<synchronous>, transform_indices = @transform_3, window_bounds = array<i64: 32, 32>}, {pipeline_mode = #tpu.pipeline_mode<synchronous>, transform_indices = @transform_4, window_bounds = array<i64: 1, 32>}, {pipeline_mode = #tpu.pipeline_mode<synchronous>, transform_indices = @transform_5, window_bounds = array<i64: 32, 10>}, {pipeline_mode = #tpu.pipeline_mode<synchronous>, transform_indices = @transform_6, window_bounds = array<i64: 1, 10>}, {transform_indices = @transform_7, window_bounds = array<i64: 8, 10>}]} {
    %c0 = arith.constant 0 : index
    %c0_0 = arith.constant 0 : index
    %0 = vector.load %arg1[%c0, %c0_0] : memref<8x16xf32, #tpu.memory_space<vmem>>, vector<8x16xf32>
    %c0_1 = arith.constant 0 : index
    %c0_2 = arith.constant 0 : index
    %1 = vector.load %arg2[%c0_1, %c0_2] : memref<16x32xf32, #tpu.memory_space<vmem>>, vector<16x32xf32>
    %cst = arith.constant dense<0.000000e+00> : vector<8x32xf32>
    %2 = tpu.matmul %0, %1, %cst {dimension_numbers = #tpu.dot_dimension_numbers<[1], [0], [0], [1], [0, 0, 1, 1], [], []>} : vector<8x16xf32>, vector<16x32xf32>, vector<8x32xf32> -> vector<8x32xf32>
    %c0_3 = arith.constant 0 : index
    %c0_4 = arith.constant 0 : index
    %3 = vector.load %arg3[%c0_3, %c0_4] : memref<1x32xf32, #tpu.memory_space<vmem>>, vector<1x32xf32>
    %4 = vector.broadcast %3 : vector<1x32xf32> to vector<8x32xf32>
    %5 = arith.addf %2, %4 : vector<8x32xf32>
    %cst_5 = arith.constant 0.000000e+00 : f32
    %6 = vector.broadcast %cst_5 : f32 to vector<8x32xf32>
    %7 = arith.maximumf %5, %6 : vector<8x32xf32>
    %c0_6 = arith.constant 0 : index
    %c0_7 = arith.constant 0 : index
    %8 = vector.load %arg4[%c0_6, %c0_7] : memref<32x32xf32, #tpu.memory_space<vmem>>, vector<32x32xf32>
    %cst_8 = arith.constant dense<0.000000e+00> : vector<8x32xf32>
    %9 = tpu.matmul %7, %8, %cst_8 {dimension_numbers = #tpu.dot_dimension_numbers<[1], [0], [0], [1], [0, 0, 1, 1], [], []>} : vector<8x32xf32>, vector<32x32xf32>, vector<8x32xf32> -> vector<8x32xf32>
    %c0_9 = arith.constant 0 : index
    %c0_10 = arith.constant 0 : index
    %10 = vector.load %arg5[%c0_9, %c0_10] : memref<1x32xf32, #tpu.memory_space<vmem>>, vector<1x32xf32>
    %11 = vector.broadcast %10 : vector<1x32xf32> to vector<8x32xf32>
    %12 = arith.addf %9, %11 : vector<8x32xf32>
    %cst_11 = arith.constant 0.000000e+00 : f32
    %13 = vector.broadcast %cst_11 : f32 to vector<8x32xf32>
    %14 = arith.maximumf %12, %13 : vector<8x32xf32>
    %c0_12 = arith.constant 0 : index
    %c0_13 = arith.constant 0 : index
    %15 = vector.load %arg6[%c0_12, %c0_13] : memref<32x10xf32, #tpu.memory_space<vmem>>, vector<32x10xf32>
    %cst_14 = arith.constant dense<0.000000e+00> : vector<8x10xf32>
    %16 = tpu.matmul %14, %15, %cst_14 {dimension_numbers = #tpu.dot_dimension_numbers<[1], [0], [0], [1], [0, 0, 1, 1], [], []>} : vector<8x32xf32>, vector<32x10xf32>, vector<8x10xf32> -> vector<8x10xf32>
    %c0_15 = arith.constant 0 : index
    %c0_16 = arith.constant 0 : index
    %17 = vector.load %arg7[%c0_15, %c0_16] : memref<1x10xf32, #tpu.memory_space<vmem>>, vector<1x10xf32>
    %18 = vector.broadcast %17 : vector<1x10xf32> to vector<8x10xf32>
    %19 = arith.addf %16, %18 : vector<8x10xf32>
    %cst_17 = arith.constant dense<0xFF800000> : vector<8xf32>
    %20 = vector.multi_reduction <maximumf>, %19, %cst_17 [1] : vector<8x10xf32> to vector<8xf32>
    %21 = vector.shape_cast %20 : vector<8xf32> to vector<8x1xf32>
    %22 = vector.broadcast %21 : vector<8x1xf32> to vector<8x10xf32>
    %23 = arith.subf %19, %22 : vector<8x10xf32>
    %24 = math.exp %23 : vector<8x10xf32>
    %cst_18 = arith.constant dense<0.000000e+00> : vector<8xf32>
    %25 = vector.multi_reduction <add>, %24, %cst_18 [1] : vector<8x10xf32> to vector<8xf32>
    %26 = vector.shape_cast %25 : vector<8xf32> to vector<8x1xf32>
    %27 = math.log %26 : vector<8x1xf32>
    %28 = vector.broadcast %27 : vector<8x1xf32> to vector<8x10xf32>
    %29 = arith.subf %23, %28 : vector<8x10xf32>
    %c0_19 = arith.constant 0 : index
    %c0_20 = arith.constant 0 : index
    %30 = vector.load %arg8[%c0_19, %c0_20] : memref<8x10xf32, #tpu.memory_space<vmem>>, vector<8x10xf32>
    tpu.vector_store %arg8[%c0_19, %c0_20], %29 {strides = array<i32>} : memref<8x10xf32, #tpu.memory_space<vmem>>, vector<8x10xf32>,
    return
  }
  func.func @transform_0(%arg0: i32) -> (i32, i32) {
    %c0_i32 = arith.constant 0 : i32
    %c0_i32_0 = arith.constant 0 : i32
    return %arg0, %c0_i32 : i32, i32
  }
  func.func @transform_1(%arg0: i32) -> (i32, i32) {
    %c0_i32 = arith.constant 0 : i32
    %c0_i32_0 = arith.constant 0 : i32
    %c0_i32_1 = arith.constant 0 : i32
    return %c0_i32, %c0_i32_0 : i32, i32
  }
  func.func @transform_2(%arg0: i32) -> (i32, i32) {
    %c0_i32 = arith.constant 0 : i32
    %c0_i32_0 = arith.constant 0 : i32
    %c0_i32_1 = arith.constant 0 : i32
    return %c0_i32, %c0_i32_0 : i32, i32
  }
  func.func @transform_3(%arg0: i32) -> (i32, i32) {
    %c0_i32 = arith.constant 0 : i32
    %c0_i32_0 = arith.constant 0 : i32
    %c0_i32_1 = arith.constant 0 : i32
    return %c0_i32, %c0_i32_0 : i32, i32
  }
  func.func @transform_4(%arg0: i32) -> (i32, i32) {
    %c0_i32 = arith.constant 0 : i32
    %c0_i32_0 = arith.constant 0 : i32
    %c0_i32_1 = arith.constant 0 : i32
    return %c0_i32, %c0_i32_0 : i32, i32
  }
  func.func @transform_5(%arg0: i32) -> (i32, i32) {
    %c0_i32 = arith.constant 0 : i32
    %c0_i32_0 = arith.constant 0 : i32
    %c0_i32_1 = arith.constant 0 : i32
    return %c0_i32, %c0_i32_0 : i32, i32
  }
  func.func @transform_6(%arg0: i32) -> (i32, i32) {
    %c0_i32 = arith.constant 0 : i32
    %c0_i32_0 = arith.constant 0 : i32
    %c0_i32_1 = arith.constant 0 : i32
    return %c0_i32, %c0_i32_0 : i32, i32
  }
  func.func @transform_7(%arg0: i32) -> (i32, i32) {
    %c0_i32 = arith.constant 0 : i32
    %c0_i32_0 = arith.constant 0 : i32
    return %arg0, %c0_i32 : i32, i32
  }
}

</mosaic_0001>

<llo_original>
// kernel: classifier_mlp_dropout_forward.1
$region0: #{classifier_mlp_dropout_forward.1}
  #allocation0 [shape = 'u32[]', space=smem, size = 0x4, offset = 0x4, fixed_abs, tag = 'smem constant byte address 0x4 - core index']
  #allocation1 [shape = 'u32[144,128]{1,0:T(1,128)}', space=vmem, size = 0x12000, scoped, tag = 'internal scratch']
  %s0 = inlined_call_operand.hbm [shape: f32[8,16], index: 0, kind: input, shape index: {}]
  %s1 = inlined_call_operand.vmem [shape: f32[16,32], index: 1, kind: input, shape index: {}]
  %s2 = inlined_call_operand.vmem [shape: f32[1,32], index: 2, kind: input, shape index: {}]
  %s3 = inlined_call_operand.vmem [shape: f32[32,32], index: 3, kind: input, shape index: {}]
  %s4 = inlined_call_operand.vmem [shape: f32[1,32], index: 4, kind: input, shape index: {}]
  %s5 = inlined_call_operand.vmem [shape: f32[32,10], index: 5, kind: input, shape index: {}]
  %s6 = inlined_call_operand.vmem [shape: f32[1,10], index: 6, kind: input, shape index: {}]
  %s7 = inlined_call_operand.hbm [shape: f32[8,10], index: 7, kind: output, shape index: {}]
  %s8 = sld [smem:[#allocation0]]
  $region42: #{classifier_mlp_dropout_forward.1} parent=0
    _
  %s10 = ssub.s32 1, %s8
  %s11 = scalar_select 0, %s10, %s8
  $region1: #{classifier_mlp_dropout_forward.1} parent=0
    #allocation2 [shape = 'u8[4096]{0}', space=vmem, size = 0x1000, scoped, tag = 'input window, operand 0, single buffered']
    #allocation3 [shape = 's32[1]{0}', space=sflag, size = 0x4, scoped, tag = 'scoped memory for classifier_mlp_dropout_forward.1']
    #allocation4 [shape = 's32[1]{0}', space=sflag, size = 0x4, scoped, tag = 'scoped memory for classifier_mlp_dropout_forward.1']
    #allocation5 [shape = 'u8[4096]{0}', space=vmem, size = 0x1000, scoped, tag = 'output window, operand 0, single buffered']
    %12 = vsyncpa [#allocation3], 0
    %13 = vsyncpa [#allocation4], 0
    // Predicated region
    $region2: #{classifier_mlp_dropout_forward.1} parent=1 // pred_check
      _
    $region3: #{classifier_mlp_dropout_forward.1} parent=1 // pred_check_branch
      %15 = sbr.rel (0) target = $region5
    $region4: #{classifier_mlp_dropout_forward.1} parent=1 // pred_region
      %s17 = ssub.s32 128, 128
      %18 = vsyncadd [#allocation3], %s17
      %s20 = sshll.u32 [#allocation2], 4
      %s21 = int_to_ptr.vmem [resolvable:$true] %s20
      %23 = dma.hbm_to_vmem [thread:$0]  %s0, 128, %s21, [#allocation3]
    $region5: #{classifier_mlp_dropout_forward.1} parent=1 // pred_fallthru
      _
    // Predicated region
    $region6: #{classifier_mlp_dropout_forward.1} parent=1 // pred_check
      _
    $region7: #{classifier_mlp_dropout_forward.1} parent=1 // pred_check_branch
      %25 = sbr.rel (0) target = $region9
    $region8: #{classifier_mlp_dropout_forward.1} parent=1 // pred_region
      _
    $region9: #{classifier_mlp_dropout_forward.1} parent=1 // pred_fallthru
      _
    // Predicated region
    $region10: #{classifier_mlp_dropout_forward.1} parent=1 // pred_check
      _
    $region11: #{classifier_mlp_dropout_forward.1} parent=1 // pred_check_branch
      %27 = sbr.rel (0) target = $region13
    $region12: #{classifier_mlp_dropout_forward.1} parent=1 // pred_region
      _
    $region13: #{classifier_mlp_dropout_forward.1} parent=1 // pred_fallthru
      _
    // Predicated region
    $region14: #{classifier_mlp_dropout_forward.1} parent=1 // pred_check
      _
    $region15: #{classifier_mlp_dropout_forward.1} parent=1 // pred_check_branch
      %29 = sbr.rel (0) target = $region17
    $region16: #{classifier_mlp_dropout_forward.1} parent=1 // pred_region
      _
    $region17: #{classifier_mlp_dropout_forward.1} parent=1 // pred_fallthru
      _
    // Predicated region
    $region18: #{classifier_mlp_dropout_forward.1} parent=1 // pred_check
      _
    $region19: #{classifier_mlp_dropout_forward.1} parent=1 // pred_check_branch
      %31 = sbr.rel (0) target = $region21
    $region20: #{classifier_mlp_dropout_forward.1} parent=1 // pred_region
      _
    $region21: #{classifier_mlp_dropout_forward.1} parent=1 // pred_fallthru
      _
    // Predicated region
    $region22: #{classifier_mlp_dropout_forward.1} parent=1 // pred_check
      _
    $region23: #{classifier_mlp_dropout_forward.1} parent=1 // pred_check_branch
      %33 = sbr.rel (0) target = $region25
    $region24: #{classifier_mlp_dropout_forward.1} parent=1 // pred_region
      _
    $region25: #{classifier_mlp_dropout_forward.1} parent=1 // pred_fallthru
      _
    // Predicated region
    $region26: #{classifier_mlp_dropout_forward.1} parent=1 // pred_check
      _
    $region27: #{classifier_mlp_dropout_forward.1} parent=1 // pred_check_branch
      %35 = sbr.rel (0) target = $region29
    $region28: #{classifier_mlp_dropout_forward.1} parent=1 // pred_region
      _
    $region29: #{classifier_mlp_dropout_forward.1} parent=1 // pred_fallthru
      _
    // Predicated region
    $region30: #{classifier_mlp_dropout_forward.1} parent=1 // pred_check
      _
    $region31: #{classifier_mlp_dropout_forward.1} parent=1 // pred_check_branch
      %37 = sbr.rel (0) target = $region33
    $region32: #{classifier_mlp_dropout_forward.1} parent=1 // pred_region
      %38 = dma.done [#allocation3], 128
    $region33: #{classifier_mlp_dropout_forward.1} parent=1 // pred_fallthru
      _
    %v39 = vld [vmem:[#allocation2] sm:$0xff]
    %v40 = vld [vmem:[%s1] sm:$0xff]
    %v41 = vld [vmem:[%s1 + $0x8] sm:$0xff]
    %v42 = vld [vmem:[%s2] sm:$0x1]
    %v44 = vlaneseq
    %v45 = vshrl.u32 %v44, 7
    %v46 = vsub.s32 0, %v45
    %v47 = vrot.slane %v42, %v46
    %vm49 = vcmask 130048
    %v51 = vsel %vm49, %v39, 0
    %53 = vmatprep.subr.mxu0 0.0
    %54 = vmatpush1.msra.mxu0 %v40
    %55 = vmatprep.subr.mxu0 0.0
    %56 = vmatpush1.msra.mxu0 %v41
    %57 = vmatprep.subr.mxu0 0.0
    %58 = vmatpush1.msra.mxu0 0.0
    %59 = vmatprep.subr.mxu0 0.0
    %60 = vmatpush1.msra.mxu0 0.0
    %61 = vmatprep.subr.mxu0 0.0
    %62 = vmatpush1.msra.mxu0 0.0
    %63 = vmatprep.subr.mxu0 0.0
    %64 = vmatpush1.msra.mxu0 0.0
    %65 = vmatprep.subr.mxu0 0.0
    %66 = vmatpush1.msra.mxu0 0.0
    %67 = vmatprep.subr.mxu0 0.0
    %68 = vmatpush1.msra.mxu0 0.0
    %69 = vmatprep.subr.mxu0 0.0
    %70 = vmatpush1.msra.mxu0 0.0
    %71 = vmatprep.subr.mxu0 0.0
    %72 = vmatpush1.msra.mxu0 0.0
    %73 = vmatprep.subr.mxu0 0.0
    %74 = vmatpush1.msra.mxu0 0.0
    %75 = vmatprep.subr.mxu0 0.0
    %76 = vmatpush1.msra.mxu0 0.0
    %77 = vmatprep.subr.mxu0 0.0
    %78 = vmatpush1.msra.mxu0 0.0
    %79 = vmatprep.subr.mxu0 0.0
    %80 = vmatpush1.msra.mxu0 0.0
    %81 = vmatprep.subr.mxu0 0.0
    %82 = vmatpush1.msra.mxu0 0.0
    %83 = vmatprep.subr.mxu0 0.0
    %84 = vmatpush1.msra.mxu0 0.0
    %85 = vmatprep.subr.mxu0 0.0
    %86 = vmatpush1.msra.mxu0 0.0
    %87 = vmatprep.subr.mxu0 0.0
    %88 = vmatpush1.msra.mxu0 0.0
    %89 = vmatprep.subr.mxu0 0.0
    %90 = vmatpush1.msra.mxu0 0.0
    %91 = vmatprep.subr.mxu0 0.0
    %92 = vmatpush1.msra.mxu0 0.0
    %93 = vmatprep.subr.mxu0 0.0
    %94 = vmatpush1.msra.mxu0 0.0
    %95 = vmatprep.subr.mxu0 0.0
    %96 = vmatpush1.msra.mxu0 0.0
    %97 = vmatprep.subr.mxu0 0.0
    %98 = vmatpush1.msra.mxu0 0.0
    %99 = vmatprep.subr.mxu0 0.0
    %100 = vmatpush1.msra.mxu0 0.0
    %101 = vmatprep.subr.mxu0 0.0
    %102 = vmatpush1.msra.mxu0 0.0
    %103 = vmatprep.subr.mxu0 0.0
    %104 = vmatpush1.msra.mxu0 0.0
    %105 = vmatprep.subr.mxu0 0.0
    %106 = vmatpush1.msra.mxu0 0.0
    %107 = vmatprep.subr.mxu0 0.0
    %108 = vmatpush1.msra.mxu0 0.0
    %109 = vmatprep.subr.mxu0 0.0
    %110 = vmatpush1.msra.mxu0 0.0
    %111 = vmatprep.subr.mxu0 0.0
    %112 = vmatpush1.msra.mxu0 0.0
    %113 = vmatprep.subr.mxu0 0.0
    %114 = vmatpush1.msra.mxu0 0.0
    %115 = vmatprep.subr.mxu0 0.0
    %116 = vmatpush1.msra.mxu0 0.0
    %117 = vmatprep.mubr.f32.mxu0 0.0
    %118 = vmatmul.mubr.f32.gmra.mrb[0].mxu0 %v51
    %v119 = vpop.f32.mrb[0].mxu0
    %v120 = vadd.f32 %v47, %v119
    %v121 = vpop.f32.mrb[0].mxu0
    %122 = vdwg.mxu0
    %v123 = vmax.f32 %v120, 0.0
    %v124 = vld [vmem:[%s3] sm:$0xff]
    %v125 = vld [vmem:[%s3 + $0x8] sm:$0xff]
    %v126 = vld [vmem:[%s3 + $0x10] sm:$0xff]
    %v127 = vld [vmem:[%s3 + $0x18] sm:$0xff]
    %v128 = vld [vmem:[%s4] sm:$0x1]
    %v130 = vlaneseq
    %v131 = vshrl.u32 %v130, 7
    %v132 = vsub.s32 0, %v131
    %v133 = vrot.slane %v128, %v132
    %vm135 = vcmask 261120
    %v137 = vsel %vm135, %v123, 0
    %139 = vmatprep.subr.mxu0 0.0
    %140 = vmatpush1.msra.mxu0 %v124
    %141 = vmatprep.subr.mxu0 0.0
    %142 = vmatpush1.msra.mxu0 %v125
    %143 = vmatprep.subr.mxu0 0.0
    %144 = vmatpush1.msra.mxu0 %v126
    %145 = vmatprep.subr.mxu0 0.0
    %146 = vmatpush1.msra.mxu0 %v127
    %147 = vmatprep.subr.mxu0 0.0
    %148 = vmatpush1.msra.mxu0 0.0
    %149 = vmatprep.subr.mxu0 0.0
    %150 = vmatpush1.msra.mxu0 0.0
    %151 = vmatprep.subr.mxu0 0.0
    %152 = vmatpush1.msra.mxu0 0.0
    %153 = vmatprep.subr.mxu0 0.0
    %154 = vmatpush1.msra.mxu0 0.0
    %155 = vmatprep.subr.mxu0 0.0
    %156 = vmatpush1.msra.mxu0 0.0
    %157 = vmatprep.subr.mxu0 0.0
    %158 = vmatpush1.msra.mxu0 0.0
    %159 = vmatprep.subr.mxu0 0.0
    %160 = vmatpush1.msra.mxu0 0.0
    %161 = vmatprep.subr.mxu0 0.0
    %162 = vmatpush1.msra.mxu0 0.0
    %163 = vmatprep.subr.mxu0 0.0
    %164 = vmatpush1.msra.mxu0 0.0
    %165 = vmatprep.subr.mxu0 0.0
    %166 = vmatpush1.msra.mxu0 0.0
    %167 = vmatprep.subr.mxu0 0.0
    %168 = vmatpush1.msra.mxu0 0.0
    %169 = vmatprep.subr.mxu0 0.0
    %170 = vmatpush1.msra.mxu0 0.0
    %171 = vmatprep.subr.mxu0 0.0
    %172 = vmatpush1.msra.mxu0 0.0
    %173 = vmatprep.subr.mxu0 0.0
    %174 = vmatpush1.msra.mxu0 0.0
    %175 = vmatprep.subr.mxu0 0.0
    %176 = vmatpush1.msra.mxu0 0.0
    %177 = vmatprep.subr.mxu0 0.0
    %178 = vmatpush1.msra.mxu0 0.0
    %179 = vmatprep.subr.mxu0 0.0
    %180 = vmatpush1.msra.mxu0 0.0
    %181 = vmatprep.subr.mxu0 0.0
    %182 = vmatpush1.msra.mxu0 0.0
    %183 = vmatprep.subr.mxu0 0.0
    %184 = vmatpush1.msra.mxu0 0.0
    %185 = vmatprep.subr.mxu0 0.0
    %186 = vmatpush1.msra.mxu0 0.0
    %187 = vmatprep.subr.mxu0 0.0
    %188 = vmatpush1.msra.mxu0 0.0
    %189 = vmatprep.subr.mxu0 0.0
    %190 = vmatpush1.msra.mxu0 0.0
    %191 = vmatprep.subr.mxu0 0.0
    %192 = vmatpush1.msra.mxu0 0.0
    %193 = vmatprep.subr.mxu0 0.0
    %194 = vmatpush1.msra.mxu0 0.0
    %195 = vmatprep.subr.mxu0 0.0
    %196 = vmatpush1.msra.mxu0 0.0
    %197 = vmatprep.subr.mxu0 0.0
    %198 = vmatpush1.msra.mxu0 0.0
    %199 = vmatprep.subr.mxu0 0.0
    %200 = vmatpush1.msra.mxu0 0.0
    %201 = vmatprep.subr.mxu0 0.0
    %202 = vmatpush1.msra.mxu0 0.0
    %203 = vmatprep.mubr.f32.mxu0 0.0
    %204 = vmatmul.mubr.f32.gmra.mrb[0].mxu0 %v137
    %v205 = vpop.f32.mrb[0].mxu0
    %v206 = vadd.f32 %v133, %v205
    %v207 = vpop.f32.mrb[0].mxu0
    %208 = vdwg.mxu0
    %v209 = vmax.f32 %v206, 0.0
    %v210 = vld [vmem:[%s5] sm:$0xff]
    %v211 = vld [vmem:[%s5 + $0x8] sm:$0xff]
    %v212 = vld [vmem:[%s5 + $0x10] sm:$0xff]
    %v213 = vld [vmem:[%s5 + $0x18] sm:$0xff]
    %v214 = vld [vmem:[%s6] sm:$0x1]
    %v216 = vlaneseq
    %v217 = vshrl.u32 %v216, 7
    %v218 = vsub.s32 0, %v217
    %v219 = vrot.slane %v214, %v218
    %v222 = vsel %vm135, %v209, 0
    %224 = vmatprep.subr.mxu0 0.0
    %225 = vmatpush1.msra.mxu0 %v210
    %226 = vmatprep.subr.mxu0 0.0
    %227 = vmatpush1.msra.mxu0 %v211
    %228 = vmatprep.subr.mxu0 0.0
    %229 = vmatpush1.msra.mxu0 %v212
    %230 = vmatprep.subr.mxu0 0.0
    %231 = vmatpush1.msra.mxu0 %v213
    %232 = vmatprep.subr.mxu0 0.0
    %233 = vmatpush1.msra.mxu0 0.0
    %234 = vmatprep.subr.mxu0 0.0
    %235 = vmatpush1.msra.mxu0 0.0
    %236 = vmatprep.subr.mxu0 0.0
    %237 = vmatpush1.msra.mxu0 0.0
    %238 = vmatprep.subr.mxu0 0.0
    %239 = vmatpush1.msra.mxu0 0.0
    %240 = vmatprep.subr.mxu0 0.0
    %241 = vmatpush1.msra.mxu0 0.0
    %242 = vmatprep.subr.mxu0 0.0
    %243 = vmatpush1.msra.mxu0 0.0
    %244 = vmatprep.subr.mxu0 0.0
    %245 = vmatpush1.msra.mxu0 0.0
    %246 = vmatprep.subr.mxu0 0.0
    %247 = vmatpush1.msra.mxu0 0.0
    %248 = vmatprep.subr.mxu0 0.0
    %249 = vmatpush1.msra.mxu0 0.0
    %250 = vmatprep.subr.mxu0 0.0
    %251 = vmatpush1.msra.mxu0 0.0
    %252 = vmatprep.subr.mxu0 0.0
    %253 = vmatpush1.msra.mxu0 0.0
    %254 = vmatprep.subr.mxu0 0.0
    %255 = vmatpush1.msra.mxu0 0.0
    %256 = vmatprep.subr.mxu0 0.0
    %257 = vmatpush1.msra.mxu0 0.0
    %258 = vmatprep.subr.mxu0 0.0
    %259 = vmatpush1.msra.mxu0 0.0
    %260 = vmatprep.subr.mxu0 0.0
    %261 = vmatpush1.msra.mxu0 0.0
    %262 = vmatprep.subr.mxu0 0.0
    %263 = vmatpush1.msra.mxu0 0.0
    %264 = vmatprep.subr.mxu0 0.0
    %265 = vmatpush1.msra.mxu0 0.0
    %266 = vmatprep.subr.mxu0 0.0
    %267 = vmatpush1.msra.mxu0 0.0
    %268 = vmatprep.subr.mxu0 0.0
    %269 = vmatpush1.msra.mxu0 0.0
    %270 = vmatprep.subr.mxu0 0.0
    %271 = vmatpush1.msra.mxu0 0.0
    %272 = vmatprep.subr.mxu0 0.0
    %273 = vmatpush1.msra.mxu0 0.0
    %274 = vmatprep.subr.mxu0 0.0
    %275 = vmatpush1.msra.mxu0 0.0
    %276 = vmatprep.subr.mxu0 0.0
    %277 = vmatpush1.msra.mxu0 0.0
    %278 = vmatprep.subr.mxu0 0.0
    %279 = vmatpush1.msra.mxu0 0.0
    %280 = vmatprep.subr.mxu0 0.0
    %281 = vmatpush1.msra.mxu0 0.0
    %282 = vmatprep.subr.mxu0 0.0
    %283 = vmatpush1.msra.mxu0 0.0
    %284 = vmatprep.subr.mxu0 0.0
    %285 = vmatpush1.msra.mxu0 0.0
    %286 = vmatprep.subr.mxu0 0.0
    %287 = vmatpush1.msra.mxu0 0.0
    %288 = vmatprep.mubr.f32.mxu0 0.0
    %289 = vmatmul.mubr.f32.gmra.mrb[0].mxu0 %v222
    %v290 = vpop.f32.mrb[0].mxu0
    %v291 = vadd.f32 %v219, %v290
    %v292 = vpop.f32.mrb[0].mxu0
    %293 = vdwg.mxu0
    %vm294 = vcmask 80896
    %v295 = vsel %vm294, %v291, -inf
    %296 = vmax.xlane.f32.xlu0 %v295
    %v297 = vpop.xlane.xlu0 %296
    %v298 = vsub.f32 %v291, %v297
    %v299 = vmul.f32 %v298, 1.442695
    %v300 = vpow.pop %v299
    %v301 = vsel %vm294, %v300, 0.0
    %302 = vadd.xlane.f32.xlu0 %v301
    %v303 = vpop.xlane.xlu0 %302
    %v304 = vlog2.pop %v303
    %v305 = vmul.f32 %v304, 0.6931472
    %v306 = vsub.f32 %v298, %v305
    %307 = vst.msk [vmem:[#allocation5] sm:$0xff] %vm294, %v306
    // Predicated region
    $region34: #{classifier_mlp_dropout_forward.1} parent=1 // pred_check
      _
    $region35: #{classifier_mlp_dropout_forward.1} parent=1 // pred_check_branch
      %309 = sbr.rel (0) target = $region37
    $region36: #{classifier_mlp_dropout_forward.1} parent=1 // pred_region
      %s311 = ssub.s32 128, 128
      %312 = vsyncadd [#allocation4], %s311
      %s314 = sshll.u32 [#allocation5], 4
      %s315 = int_to_ptr.vmem [resolvable:$true] %s314
      %317 = dma.vmem_to_hbm [thread:$0]  %s315, 128, %s7, [#allocation4]
    $region37: #{classifier_mlp_dropout_forward.1} parent=1 // pred_fallthru
      _
    // Predicated region
    $region38: #{classifier_mlp_dropout_forward.1} parent=1 // pred_check
      _
    $region39: #{classifier_mlp_dropout_forward.1} parent=1 // pred_check_branch
      %319 = sbr.rel (0) target = $region41
    $region40: #{classifier_mlp_dropout_forward.1} parent=1 // pred_region
      %320 = dma.done [#allocation4], 128
    $region41: #{classifier_mlp_dropout_forward.1} parent=1 // pred_fallthru
      _
    %321 = vsyncpa [#allocation3], 1
    %322 = vsyncpa [#allocation4], 1

</llo_original>
